<compile_context>
chip_gen: v7x
topology: tpu7x:2x2x1
jax: 0.10.0
libtpu: 0.0.40
codegen_flags: <defaults>
</compile_context>

<pallas_src>
import jax
import jax.numpy as jnp
from jax.experimental import pallas as pl
from jax.experimental.pallas import tpu as pltpu

N_BINS = 128


def _round_up(x, m):
    return ((x + m - 1) // m) * m


# -----------------------------------------------------------------------------
# Pallas kernel: fused conv_out (1x1, 48 -> n_bins) + softmax(dim=channels)
#                + sum_over_bins(depth_scores * bin_centers)
# Layout: pixels on lanes, bins on sublanes.
# -----------------------------------------------------------------------------
def _conv_softmax_depth_kernel(x_ref, w_ref, b_ref, mt_ref, o_ref):
    # x_ref : (1, 48, TP)  bf16  activation tile (channels x pixels)
    # w_ref : (nb, 48)     bf16  conv_out weight
    # b_ref : (nb, 1)      f32   conv_out bias
    # mt_ref: (1, 2, nb)   f32   row 0 = bin centers (this batch elem), row 1 = ones
    # o_ref : (1, 1, TP)   f32   per-pixel depth prediction (lane-dense)
    x = x_ref[0]                                                  # (48, TP)
    w = w_ref[...]                                                # (nb, 48)

    # 1x1 conv == matmul on the MXU (bf16 inputs, f32 accumulate)
    logits = jnp.dot(w, x, preferred_element_type=jnp.float32)    # (nb, TP) f32
    logits = logits + b_ref[...]                                  # bias broadcast over lanes

    # numerically-stable softmax numerator over the bin (sublane) axis
    m = jnp.max(logits, axis=0, keepdims=True)                    # (1, TP)
    e = jnp.exp(logits - m)                                       # (nb, TP)

    # fused reduction: one small MXU matmul gives both
    #   r[0] = sum_b bin_center_b * e_b   and   r[1] = sum_b e_b
    r = jnp.dot(mt_ref[0], e, preferred_element_type=jnp.float32)  # (2, TP)

    # prediction = (sum e*bc) / (sum e), divide done on the EUP
    o_ref[0] = r[0:1, :] * pl.reciprocal(r[1:2, :], approx=True)   # (1, TP)


def conv_out_and_prediction(ram_ncp, w, bias, bin_centers, *, tp_target=2048):
    """ram_ncp: (N, 48, P) activations (channels-major, pixels last)
       w: (n_bins, 48) conv_out weight, bias: (n_bins,), bin_centers: (N, n_bins)
       returns prediction of shape (N, 1, P) f32."""
    N, C, P = ram_ncp.shape
    nb = w.shape[0]

    # pixel tile: multiple of 128, capped so (tile + (nb,TP) intermediates) x 2
    # buffers stays far below the 64 MiB v7x VMEM; pad P so TP | P_pad.
    tp = min(tp_target, _round_up(P, 128))
    p_pad = _round_up(P, tp)
    if p_pad != P:
        ram_ncp = jnp.pad(ram_ncp, ((0, 0), (0, 0), (0, p_pad - P)))

    x = ram_ncp.astype(jnp.bfloat16)
    w_bf = w.astype(jnp.bfloat16)
    b2 = bias.reshape(nb, 1).astype(jnp.float32)
    # (N, 2, nb): row 0 = bin centers, row 1 = ones (for the fused denominator)
    mt = jnp.stack(
        [bin_centers.astype(jnp.float32),
         jnp.ones((N, nb), jnp.float32)], axis=1)

    out = pl.pallas_call(
        _conv_softmax_depth_kernel,
        out_shape=jax.ShapeDtypeStruct((N, 1, p_pad), jnp.float32),
        grid_spec=pltpu.PrefetchScalarGridSpec(
            num_scalar_prefetch=0,
            grid=(N, p_pad // tp),
            in_specs=[
                pl.BlockSpec((1, C, tp), lambda n, p: (n, 0, p)),
                pl.BlockSpec((nb, C), lambda n, p: (0, 0)),     # weight stays resident
                pl.BlockSpec((nb, 1), lambda n, p: (0, 0)),     # bias stays resident
                pl.BlockSpec((1, 2, nb), lambda n, p: (n, 0, 0)),
            ],
            out_specs=pl.BlockSpec((1, 1, tp), lambda n, p: (n, 0, p)),
        ),
        compiler_params=pltpu.CompilerParams(
            dimension_semantics=("parallel", "parallel"),
            vmem_limit_bytes=48 * 1024 * 1024),
    )(x, w_bf, b2, mt)
    return out[:, :, :P]


# -----------------------------------------------------------------------------
# Deterministic parameter / stand-in setup (plain JAX glue)
# -----------------------------------------------------------------------------
def make_params(key):
    ks = jax.random.split(key, 8)
    p = {}
    # conv_out: nn.Conv2d(48, n_bins, kernel_size=1) -> weight (n_bins,48,1,1), bias (n_bins,)
    p["conv_out_w"] = 0.05 * jax.random.normal(ks[0], (N_BINS, 48), jnp.float32)
    p["conv_out_b"] = 0.01 * jax.random.normal(ks[1], (N_BINS,), jnp.float32)
    # TODO(synk): real Encoder (MobileNetV2 backbone, 1280-ch features) not
    # provided in the source; stand-in projection weights only.
    p["enc_proj"] = 0.02 * jax.random.normal(ks[2], (1280, 3), jnp.float32)
    # TODO(synk): real Decoder (1280 -> 46 channels with skip connections) not
    # provided; stand-in projection weights only.
    p["dec_proj"] = 0.02 * jax.random.normal(ks[3], (46, 1280), jnp.float32)
    p["dec_prior_proj"] = 0.1 * jax.random.normal(ks[4], (46, 2), jnp.float32)
    # TODO(synk): real mViT (patch transformer, adaptive bins head) not
    # provided; stand-in heads with correct output shapes/semantics.
    p["mvit_maxd_w"] = 0.1 * jax.random.normal(ks[5], (48, 1), jnp.float32)
    p["mvit_bins_w"] = 0.1 * jax.random.normal(ks[6], (48, N_BINS), jnp.float32)
    p["mvit_mix"] = (0.05 * jax.random.normal(ks[7], (48, 48), jnp.float32)
                     + jnp.eye(48, dtype=jnp.float32))
    return p


def encoder_stub(params, rgb):
    # TODO(synk): stand-in for Encoder(); avg-pool /4 + fixed channel projection.
    N, C, H, W = rgb.shape
    pooled = rgb.reshape(N, C, H // 4, 4, W // 4, 4).mean(axis=(3, 5))
    return jnp.einsum("nchw,kc->nkhw", pooled, params["enc_proj"])


def decoder_stub(params, enc, prior):
    # TODO(synk): stand-in for Decoder(in=1280, out=46, prior_channels=2).
    N = enc.shape[0]
    Hp, Wp = prior.shape[2], prior.shape[3]
    enc_up = jax.image.resize(enc, (N, enc.shape[1], Hp, Wp), method="nearest")
    out = jnp.einsum("nchw,kc->nkhw", enc_up, params["dec_proj"])
    out = out + jnp.einsum("nchw,kc->nkhw", prior, params["dec_prior_proj"])
    return out                                             # (N, 46, Hp, Wp)


def mvit_stub(params, mvit_in):
    # TODO(synk): stand-in for mViT(); returns (pred_max_depth, bin_widths_normed,
    # range_attention_maps) with the shapes/semantics the real module produces.
    pooled = jnp.mean(mvit_in, axis=(2, 3))                                      # (N, 48)
    pred_max_depth = jax.nn.softplus(pooled @ params["mvit_maxd_w"]) + 1.0       # (N, 1), > 0
    bin_widths_normed = jax.nn.softmax(pooled @ params["mvit_bins_w"], axis=1)   # (N, n_bins)
    range_attention_maps = jnp.einsum("nchw,kc->nkhw", mvit_in, params["mvit_mix"])  # (N, 48, Hp, Wp)
    return pred_max_depth, bin_widths_normed, range_attention_maps


# -----------------------------------------------------------------------------
# UDFNet.forward
# -----------------------------------------------------------------------------
def udfnet_forward(params, rgb, prior_parametrization, max_depth=None):
    encoder_out = encoder_stub(params, rgb)
    decoder_out = decoder_stub(params, encoder_out, prior_parametrization)   # (N, 46, Hp, Wp)

    mvit_in = jnp.concatenate((decoder_out, prior_parametrization), axis=1)  # (N, 48, Hp, Wp)
    pred_max_depth, bin_widths_normed, range_attention_maps = mvit_stub(params, mvit_in)

    # bin edges / centers (exact match to the PyTorch code)
    bin_edges_normed = jnp.cumsum(bin_widths_normed, axis=1)                  # (N, n_bins)
    bin_edges_normed = jnp.pad(bin_edges_normed, ((0, 0), (1, 0)),
                               constant_values=0.0)                           # (N, n_bins+1)
    if max_depth is None:
        bin_edges = bin_edges_normed * pred_max_depth
    else:
        bin_edges = bin_edges_normed * max_depth
    bin_centers = 0.5 * (bin_edges[:, :-1] + bin_edges[:, 1:])                # (N, n_bins)

    # hot path in Pallas: conv_out (1x1) + softmax(channels) + bin-weighted sum.
    # NCHW -> (N, C, P) is a free reshape (no transpose/HBM round trip).
    N, C48, Hp, Wp = range_attention_maps.shape
    ram_ncp = range_attention_maps.reshape(N, C48, Hp * Wp)
    pred_flat = conv_out_and_prediction(ram_ncp, params["conv_out_w"],
                                        params["conv_out_b"], bin_centers)    # (N, 1, P)
    prediction = pred_flat.reshape(N, 1, Hp, Wp)                              # NCHW, keepdim=True

    return prediction, bin_edges


# Pure-JAX reference for the Pallas-covered part (correctness check).
def _reference_prediction(range_attention_maps, w, b, bin_centers):
    logits = jnp.einsum("nchw,kc->nkhw", range_attention_maps, w) + b[None, :, None, None]
    scores = jax.nn.softmax(logits, axis=1)
    return jnp.sum(scores * bin_centers[:, :, None, None], axis=1, keepdims=True)


if __name__ == "__main__":
    key = jax.random.PRNGKey(0)
    pkey, k_rgb, k_prior = jax.random.split(key, 3)
    params = make_params(pkey)

    # Small shapes consistent with the module: rgb N x 3 x H x W,
    # prior parametrization N x 2 x H/2 x W/2.
    N, H, W = 2, 32, 32
    rgb = jax.random.normal(k_rgb, (N, 3, H, W), jnp.float32)
    prior = jax.random.normal(k_prior, (N, 2, H // 2, W // 2), jnp.float32)

    prediction, bin_edges = udfnet_forward(params, rgb, prior, max_depth=None)
    prediction = jax.block_until_ready(prediction)
    bin_edges = jax.block_until_ready(bin_edges)

    assert prediction.shape == (N, 1, H // 2, W // 2)
    assert bin_edges.shape == (N, N_BINS + 1)

    # sanity check of the Pallas hot path against a pure-f32 JAX reference
    # (tolerance accounts for bf16 matmul inputs + approx EUP reciprocal)
    enc = encoder_stub(params, rgb)
    dec = decoder_stub(params, enc, prior)
    mvit_in = jnp.concatenate((dec, prior), axis=1)
    pmd, bwn, ram = mvit_stub(params, mvit_in)
    ben = jnp.pad(jnp.cumsum(bwn, axis=1), ((0, 0), (1, 0)), constant_values=0.0)
    be = ben * pmd
    bc = 0.5 * (be[:, :-1] + be[:, 1:])
    ref_pred = _reference_prediction(ram, params["conv_out_w"], params["conv_out_b"], bc)
    assert jnp.allclose(prediction, ref_pred, rtol=5e-2, atol=5e-3)

    print("KERNEL_OK")
</pallas_src>

<mosaic_0001>
module attributes {stable_mosaic.version = 11 : i64} {
  func.func @_conv_softmax_depth_kernel(%arg0: i32, %arg1: i32, %arg2: memref<1x48x256xbf16, #tpu.memory_space<vmem>>, %arg3: memref<128x48xbf16, #tpu.memory_space<vmem>>, %arg4: memref<128x1xf32, #tpu.memory_space<vmem>>, %arg5: memref<1x2x128xf32, #tpu.memory_space<vmem>>, %arg6: memref<1x1x256xf32, #tpu.memory_space<vmem>>) attributes {dimension_semantics = [#tpu.dimension_semantics<parallel>, #tpu.dimension_semantics<parallel>], iteration_bounds = array<i64: 2, 1>, scalar_prefetch = 0 : i64, scratch_operands = 0 : i64, tpu.core_type = #tpu.core_type<tc>, window_params = [{transform_indices = @transform_0, window_bounds = array<i64: 1, 48, 256>}, {pipeline_mode = #tpu.pipeline_mode<synchronous>, transform_indices = @transform_1, window_bounds = array<i64: 128, 48>}, {pipeline_mode = #tpu.pipeline_mode<synchronous>, transform_indices = @transform_2, window_bounds = array<i64: 128, 1>}, {transform_indices = @transform_3, window_bounds = array<i64: 1, 2, 128>}, {transform_indices = @transform_4, window_bounds = array<i64: 1, 1, 256>}]} {
    %c0 = arith.constant 0 : index
    %c0_0 = arith.constant 0 : index
    %c0_1 = arith.constant 0 : index
    %0 = vector.load %arg2[%c0, %c0_0, %c0_1] : memref<1x48x256xbf16, #tpu.memory_space<vmem>>, vector<1x48x256xbf16>
    %1 = vector.shape_cast %0 : vector<1x48x256xbf16> to vector<48x256xbf16>
    %c0_2 = arith.constant 0 : index
    %c0_3 = arith.constant 0 : index
    %2 = vector.load %arg3[%c0_2, %c0_3] : memref<128x48xbf16, #tpu.memory_space<vmem>>, vector<128x48xbf16>
    %cst = arith.constant dense<0.000000e+00> : vector<128x256xf32>
    %3 = tpu.matmul %2, %1, %cst {dimension_numbers = #tpu.dot_dimension_numbers<[1], [0], [0], [1], [0, 0, 1, 1], [], []>} : vector<128x48xbf16>, vector<48x256xbf16>, vector<128x256xf32> -> vector<128x256xf32>
    %c0_4 = arith.constant 0 : index
    %c0_5 = arith.constant 0 : index
    %4 = vector.load %arg4[%c0_4, %c0_5] : memref<128x1xf32, #tpu.memory_space<vmem>>, vector<128x1xf32>
    %5 = vector.broadcast %4 : vector<128x1xf32> to vector<128x256xf32>
    %6 = arith.addf %3, %5 : vector<128x256xf32>
    %cst_6 = arith.constant dense<0xFF800000> : vector<256xf32>
    %7 = vector.multi_reduction <maximumf>, %6, %cst_6 [0] : vector<128x256xf32> to vector<256xf32>
    %8 = vector.shape_cast %7 : vector<256xf32> to vector<1x256xf32>
    %9 = vector.broadcast %8 : vector<1x256xf32> to vector<128x256xf32>
    %10 = arith.subf %6, %9 : vector<128x256xf32>
    %11 = math.exp %10 : vector<128x256xf32>
    %c0_7 = arith.constant 0 : index
    %c0_8 = arith.constant 0 : index
    %c0_9 = arith.constant 0 : index
    %12 = vector.load %arg5[%c0_7, %c0_8, %c0_9] : memref<1x2x128xf32, #tpu.memory_space<vmem>>, vector<1x2x128xf32>
    %13 = vector.shape_cast %12 : vector<1x2x128xf32> to vector<2x128xf32>
    %cst_10 = arith.constant dense<0.000000e+00> : vector<2x256xf32>
    %14 = tpu.matmul %13, %11, %cst_10 {dimension_numbers = #tpu.dot_dimension_numbers<[1], [0], [0], [1], [0, 0, 1, 1], [], []>} : vector<2x128xf32>, vector<128x256xf32>, vector<2x256xf32> -> vector<2x256xf32>
    %15 = vector.extract_strided_slice %14 {offsets = [0, 0], sizes = [1, 256], strides = [1, 1]} : vector<2x256xf32> to vector<1x256xf32>
    %16 = vector.extract_strided_slice %14 {offsets = [1, 0], sizes = [1, 256], strides = [1, 1]} : vector<2x256xf32> to vector<1x256xf32>
    %17 = tpu.reciprocal %16 {approx = true} : vector<1x256xf32> -> vector<1x256xf32>
    %18 = arith.mulf %15, %17 : vector<1x256xf32>
    %c0_11 = arith.constant 0 : index
    %c0_12 = arith.constant 0 : index
    %c0_13 = arith.constant 0 : index
    %19 = vector.load %arg6[%c0_11, %c0_12, %c0_13] : memref<1x1x256xf32, #tpu.memory_space<vmem>>, vector<1x1x256xf32>
    %20 = vector.shape_cast %19 : vector<1x1x256xf32> to vector<1x256xf32>
    %21 = vector.shape_cast %18 : vector<1x256xf32> to vector<1x1x256xf32>
    tpu.vector_store %arg6[%c0_11, %c0_12, %c0_13], %21 {strides = array<i32>} : memref<1x1x256xf32, #tpu.memory_space<vmem>>, vector<1x1x256xf32>,
    return
  }
  func.func @transform_0(%arg0: i32, %arg1: i32) -> (i32, i32, i32) {
    %c0_i32 = arith.constant 0 : i32
    %c0_i32_0 = arith.constant 0 : i32
    return %arg0, %c0_i32, %arg1 : i32, i32, i32
  }
  func.func @transform_1(%arg0: i32, %arg1: i32) -> (i32, i32) {
    %c0_i32 = arith.constant 0 : i32
    %c0_i32_0 = arith.constant 0 : i32
    %c0_i32_1 = arith.constant 0 : i32
    return %c0_i32, %c0_i32_0 : i32, i32
  }
  func.func @transform_2(%arg0: i32, %arg1: i32) -> (i32, i32) {
    %c0_i32 = arith.constant 0 : i32
    %c0_i32_0 = arith.constant 0 : i32
    %c0_i32_1 = arith.constant 0 : i32
    return %c0_i32, %c0_i32_0 : i32, i32
  }
  func.func @transform_3(%arg0: i32, %arg1: i32) -> (i32, i32, i32) {
    %c0_i32 = arith.constant 0 : i32
    %c0_i32_0 = arith.constant 0 : i32
    %c0_i32_1 = arith.constant 0 : i32
    return %arg0, %c0_i32, %c0_i32_0 : i32, i32, i32
  }
  func.func @transform_4(%arg0: i32, %arg1: i32) -> (i32, i32, i32) {
    %c0_i32 = arith.constant 0 : i32
    %c0_i32_0 = arith.constant 0 : i32
    return %arg0, %c0_i32, %arg1 : i32, i32, i32
  }
}

</mosaic_0001>

<llo_original>
// kernel: tpu_custom_call.1
$region0: #{tpu_custom_call.1}
  #allocation0 [shape = 'u32[]', space=smem, size = 0x4, offset = 0x4, fixed_abs, tag = 'smem constant byte address 0x4 - core index']
  #allocation1 [shape = 'u32[144,128]{1,0:T(1,128)}', space=vmem, size = 0x12000, scoped, tag = 'internal scratch']
  %s0 = inlined_call_operand.vmem [shape: bf16[2,48,256], index: 0, kind: input, shape index: {}]
  %s1 = inlined_call_operand.vmem [shape: bf16[128,48], index: 1, kind: input, shape index: {}]
  %s2 = inlined_call_operand.vmem [shape: f32[128,1], index: 2, kind: input, shape index: {}]
  %s3 = inlined_call_operand.vmem [shape: f32[2,2,128], index: 3, kind: input, shape index: {}]
  %s4 = inlined_call_operand.hbm [shape: f32[2,1,256], index: 4, kind: output, shape index: {}]
  %s5 = sld [smem:[#allocation0]]
  $region49: #{tpu_custom_call.1} parent=0
    _
  %s7 = ssub.s32 1, %s5
  %s8 = scalar_select 0, %s7, %s5
  $region1: #{tpu_custom_call.1} parent=0
    #allocation2 [shape = 'u8[2048]{0}', space=vmem, size = 0x800, scoped, tag = 'output window, operand 0']
    #allocation3 [shape = 's32[2]{0}', space=sflag, size = 0x8, scoped, tag = 'scoped memory for tpu_custom_call.1']
    %9 = vsyncpa [#allocation3], 0
    %s10 = scalar_lea.sflag [#allocation3], 1
    %11 = vsyncpa %s10, 0
    loop: start=0, step=1, limit=4
    $region2: #{tpu_custom_call.1} parent=1 // loop_pre_header
      _
    $region3: #{tpu_custom_call.1} parent=1 // loop_header
      %s13 = sphi 0, %s17
      %p14 = scmp.ge.s32.totalorder %s13, 4
      %s20 = sphi 0, %s32
      %s21 = sphi 0, %s28
      %s22 = sphi 0, %s20
      %s23 = sphi 0, %s21
      %s24 = sphi 0, %s22
      %s25 = sphi 0, %s23
      %s37 = sphi 0, %s39
      %s40 = sphi 0, %s37
      %s41 = sphi 0, %s40
      %s57 = sphi 0, %s41
      %s61 = sphi 0, %s61
      %s63 = sphi 0, %s61
      %s64 = sphi 0, %s63
      %s78 = sphi 0, %s64
      %s82 = sphi 0, %s82
      %s84 = sphi 0, %s82
      %s85 = sphi 0, %s84
      %s99 = sphi 0, %s85
      %s105 = sphi 0, %s107
      %s108 = sphi 0, %s105
      %s109 = sphi 0, %s108
      %s125 = sphi 0, %s109
      %s133 = sphi 0, %s135
      %s136 = sphi 0, %s133
      %s137 = sphi 0, %s136
      %s153 = sphi 0, %s137
    $region4: #{tpu_custom_call.1} parent=1 // loop_header_branch
      %16 = sbr.rel (%p14) target = $region8
    $region5: #{tpu_custom_call.1} parent=1 // loop_body
      %s18 = ssub.s32 %s13, 1
      %s19 = ssub.s32 %s13, 2
      %s26 = sadd.s32 1, %s21
      %p27 = scmp.ge.s32.totalorder %s26, 1
      %s28 = scalar_select %p27, 0, %s26
      %s29 = sadd.s32 1, %s20
      %s30 = scalar_select %p27, %s29, %s20
      %p31 = scmp.ge.s32.totalorder %s30, 2
      %s32 = scalar_select %p31, 0, %s30
      %s33 = ssub.s32 %s20, %s32
      %s34 = ssub.s32 %s21, %s28
      %s35 = sor.u32 %s33, %s34
      %p36 = scmp.eq.s32.totalorder %s35, 0
      %s38 = sadd.s32 %s37, 1
      %s39 = scalar_select %p36, %s37, %s38
      %p42 = pneg %p36
      %p43 = scmp.eq.s32.totalorder %s13, 1
      %p44 = por %p42, %p43
      %p45 = scmp.ne.s32.totalorder %s37, %s40
      %p46 = scmp.eq.s32.totalorder %s13, 0
      %p47 = por %p45, %p46
      %p48 = scmp.ne.s32.totalorder %s37, %s40
      %p49 = scmp.eq.s32.totalorder %s18, 1
      %p50 = por %p48, %p49
      %p51 = scmp.ne.s32.totalorder %s40, %s41
      %p52 = scmp.eq.s32.totalorder %s18, 0
      %p53 = por %p51, %p52
      %p54 = scmp.ne.s32.totalorder %s40, %s41
      %p55 = scmp.eq.s32.totalorder %s19, 1
      %p56 = por %p54, %p55
      %p58 = scmp.ne.s32.totalorder %s41, %s57
      %p59 = scmp.eq.s32.totalorder %s19, 0
      %p60 = por %p58, %p59
      %s62 = sadd.s32 %s61, 1
      %p65 = scmp.eq.s32.totalorder %s13, 1
      %p66 = scmp.ne.s32.totalorder %s61, %s63
      %p67 = scmp.eq.s32.totalorder %s13, 0
      %p68 = por %p66, %p67
      %p69 = scmp.ne.s32.totalorder %s61, %s63
      %p70 = scmp.eq.s32.totalorder %s18, 1
      %p71 = por %p69, %p70
      %p72 = scmp.ne.s32.totalorder %s63, %s64
      %p73 = scmp.eq.s32.totalorder %s18, 0
      %p74 = por %p72, %p73
      %p75 = scmp.ne.s32.totalorder %s63, %s64
      %p76 = scmp.eq.s32.totalorder %s19, 1
      %p77 = por %p75, %p76
      %p79 = scmp.ne.s32.totalorder %s64, %s78
      %p80 = scmp.eq.s32.totalorder %s19, 0
      %p81 = por %p79, %p80
      %s83 = sadd.s32 %s82, 1
      %p86 = scmp.eq.s32.totalorder %s13, 1
      %p87 = scmp.ne.s32.totalorder %s82, %s84
      %p88 = scmp.eq.s32.totalorder %s13, 0
      %p89 = por %p87, %p88
      %p90 = scmp.ne.s32.totalorder %s82, %s84
      %p91 = scmp.eq.s32.totalorder %s18, 1
      %p92 = por %p90, %p91
      %p93 = scmp.ne.s32.totalorder %s84, %s85
      %p94 = scmp.eq.s32.totalorder %s18, 0
      %p95 = por %p93, %p94
      %p96 = scmp.ne.s32.totalorder %s84, %s85
      %p97 = scmp.eq.s32.totalorder %s19, 1
      %p98 = por %p96, %p97
      %p100 = scmp.ne.s32.totalorder %s85, %s99
      %p101 = scmp.eq.s32.totalorder %s19, 0
      %p102 = por %p100, %p101
      %s103 = ssub.s32 %s20, %s32
      %p104 = scmp.eq.s32.totalorder %s103, 0
      %s106 = sadd.s32 %s105, 1
      %s107 = scalar_select %p104, %s105, %s106
      %p110 = pneg %p104
      %p111 = scmp.eq.s32.totalorder %s13, 1
      %p112 = por %p110, %p111
      %p113 = scmp.ne.s32.totalorder %s105, %s108
      %p114 = scmp.eq.s32.totalorder %s13, 0
      %p115 = por %p113, %p114
      %p116 = scmp.ne.s32.totalorder %s105, %s108
      %p117 = scmp.eq.s32.totalorder %s18, 1
      %p118 = por %p116, %p117
      %p119 = scmp.ne.s32.totalorder %s108, %s109
      %p120 = scmp.eq.s32.totalorder %s18, 0
      %p121 = por %p119, %p120
      %p122 = scmp.ne.s32.totalorder %s108, %s109
      %p123 = scmp.eq.s32.totalorder %s19, 1
      %p124 = por %p122, %p123
      %p126 = scmp.ne.s32.totalorder %s109, %s125
      %p127 = scmp.eq.s32.totalorder %s19, 0
      %p128 = por %p126, %p127
      %s129 = ssub.s32 %s20, %s32
      %s130 = ssub.s32 %s21, %s28
      %s131 = sor.u32 %s129, %s130
      %p132 = scmp.eq.s32.totalorder %s131, 0
      %s134 = sadd.s32 %s133, 1
      %s135 = scalar_select %p132, %s133, %s134
      %p138 = pneg %p132
      %p139 = scmp.eq.s32.totalorder %s13, 1
      %p140 = por %p138, %p139
      %p141 = scmp.ne.s32.totalorder %s133, %s136
      %p142 = scmp.eq.s32.totalorder %s13, 0
      %p143 = por %p141, %p142
      %p144 = scmp.ne.s32.totalorder %s133, %s136
      %p145 = scmp.eq.s32.totalorder %s18, 1
      %p146 = por %p144, %p145
      %p147 = scmp.ne.s32.totalorder %s136, %s137
      %p148 = scmp.eq.s32.totalorder %s18, 0
      %p149 = por %p147, %p148
      %p150 = scmp.ne.s32.totalorder %s136, %s137
      %p151 = scmp.eq.s32.totalorder %s19, 1
      %p152 = por %p150, %p151
      %p154 = scmp.ne.s32.totalorder %s137, %s153
      %p155 = scmp.eq.s32.totalorder %s19, 0
      %p156 = por %p154, %p155
      %p157 = scmp.le.s32.totalorder 1, %s13
      %p158 = scmp.lt.s32.totalorder %s13, 3
      %p159 = pnand %p157, %p158
      %p160 = pneg %p159
      // Predicated region
      $region9: #{tpu_custom_call.1} parent=5 // pred_check
        _
      $region10: #{tpu_custom_call.1} parent=5 // pred_check_branch
        %162 = sbr.rel (%p159) target = $region12
      $region11: #{tpu_custom_call.1} parent=5 // pred_region
        %s163 = ssub.s32 %s13, 1
        // Predicated region
        $region13: #{tpu_custom_call.1} parent=11 // pred_check
          %p164 = pneg %p74
        $region14: #{tpu_custom_call.1} parent=11 // pred_check_branch
          %166 = sbr.rel (%p164) target = $region16
        $region15: #{tpu_custom_call.1} parent=11 // pred_region
          _
        $region16: #{tpu_custom_call.1} parent=11 // pred_fallthru
          _
        // Predicated region
        $region17: #{tpu_custom_call.1} parent=11 // pred_check
          %p167 = pneg %p95
        $region18: #{tpu_custom_call.1} parent=11 // pred_check_branch
          %169 = sbr.rel (%p167) target = $region20
        $region19: #{tpu_custom_call.1} parent=11 // pred_region
          _
        $region20: #{tpu_custom_call.1} parent=11 // pred_fallthru
          _
      $region12: #{tpu_custom_call.1} parent=5 // pred_fallthru
        _
      %p170 = scmp.lt.s32.totalorder %s13, 2
      // Predicated region
      $region21: #{tpu_custom_call.1} parent=5 // pred_check
        %p171 = pneg %p170
      $region22: #{tpu_custom_call.1} parent=5 // pred_check_branch
        %173 = sbr.rel (%p171) target = $region24
      $region23: #{tpu_custom_call.1} parent=5 // pred_region
        // Predicated region
        $region25: #{tpu_custom_call.1} parent=23 // pred_check
          %p174 = pneg %p47
        $region26: #{tpu_custom_call.1} parent=23 // pred_check_branch
          %176 = sbr.rel (%p174) target = $region28
        $region27: #{tpu_custom_call.1} parent=23 // pred_region
          %s177 = smul.u32 2, %s21
          %p178 = scmp.lt.s32.totalorder %s20, 1
          %s179 = scalar_select %p178, %s20, 1
          %p180 = scmp.lt.s32.totalorder %s177, 1
          %s181 = scalar_select %p180, %s177, 1
          %s182 = smul.addr %s179, 12
          %s183 = sadd.s32 %s181, %s182
          %s184 = smul.addr %s183, 4
          %s185 = scalar_lea.vmem %s0, %s184
          %s186 = smul.u32 2, %s21
        $region28: #{tpu_custom_call.1} parent=23 // pred_fallthru
          _
        // Predicated region
        $region29: #{tpu_custom_call.1} parent=23 // pred_check
          %p187 = pneg %p115
        $region30: #{tpu_custom_call.1} parent=23 // pred_check_branch
          %189 = sbr.rel (%p187) target = $region32
        $region31: #{tpu_custom_call.1} parent=23 // pred_region
          %p190 = scmp.lt.s32.totalorder %s20, 1
          %s191 = scalar_select %p190, %s20, 1
          %s192 = smul.addr %s191, 2
          %s193 = scalar_lea.vmem %s3, %s192
        $region32: #{tpu_custom_call.1} parent=23 // pred_fallthru
          _
      $region24: #{tpu_custom_call.1} parent=5 // pred_fallthru
        _
      %p194 = scmp.le.s32.totalorder 1, %s13
      %p195 = scmp.lt.s32.totalorder %s13, 3
      %p196 = pnand %p194, %p195
      %p197 = pneg %p196
      // Predicated region
      $region33: #{tpu_custom_call.1} parent=5 // pred_check
        _
      $region34: #{tpu_custom_call.1} parent=5 // pred_check_branch
        %199 = sbr.rel (%p196) target = $region36
      $region35: #{tpu_custom_call.1} parent=5 // pred_region
        %s200 = ssub.s32 %s13, 1
        %s201 = smul.u32 2, %s23
        %p202 = scmp.lt.s32.totalorder %s22, 1
        %s203 = scalar_select %p202, %s22, 1
        %p204 = scmp.lt.s32.totalorder %s201, 1
        %s205 = scalar_select %p204, %s201, 1
        %s206 = smul.addr %s203, 12
        %s207 = sadd.s32 %s205, %s206
        %s208 = smul.addr %s207, 4
        %s209 = scalar_lea.vmem %s0, %s208
        %p210 = pneg %p53
        %p211 = pneg %p50
        %p212 = pneg %p74
        %p213 = pneg %p71
        %p214 = pneg %p95
        %p215 = pneg %p92
        %p216 = scmp.lt.s32.totalorder %s22, 1
        %s217 = scalar_select %p216, %s22, 1
        %s218 = smul.addr %s217, 2
        %s219 = scalar_lea.vmem %s3, %s218
        %p220 = pneg %p121
        %p221 = pneg %p118
        %p222 = pneg %p149
        %p223 = pneg %p146
        %s224 = sand.u32 %s136, 1
        %s225 = scalar_lea.sflag [#allocation3], %s224
        %s226 = sand.u32 %s136, 1
        %s227 = smul.addr %s226, 2
        %s228 = scalar_lea.vmem [#allocation2], %s227
        %s229 = smul.u32 2, %s23
        %p230 = scmp.lt.s32.totalorder %s22, 1
        %s231 = scalar_select %p230, %s22, 1
        %p232 = scmp.lt.s32.totalorder %s229, 1
        %s233 = scalar_select %p232, %s229, 1
        %s234 = smul.addr %s231, 12
        %s235 = sadd.s32 %s233, %s234
        %s236 = smul.addr %s235, 4
        %s237 = scalar_lea.vmem %s0, %s236
        %s238 = smul.u32 2, %s23
        %p239 = scmp.lt.s32.totalorder %s22, 1
        %s240 = scalar_select %p239, %s22, 1
        %s241 = smul.addr %s240, 2
        %s242 = scalar_lea.vmem %s3, %s241
        %s243 = smul.u32 2, %s23
        %v245 = vld [vmem:[%s237] sm:$0xff]
        %v246 = vld [vmem:[%s237 + $0x8] sm:$0xff]
        %v247 = vld [vmem:[%s237 + $0x10] sm:$0xff]
        %v248 = vld [vmem:[%s237 + $0x18] sm:$0xff]
        %v249 = vld [vmem:[%s237 + $0x20] sm:$0xff]
        %v250 = vld [vmem:[%s237 + $0x28] sm:$0xff]
        %v251 = vld [vmem:[%s1] sm:$0xf]
        %v252 = vld [vmem:[%s1 + $0x4] sm:$0xf]
        %v253 = vld [vmem:[%s1 + $0x8] sm:$0xf]
        %v254 = vld [vmem:[%s1 + $0xc] sm:$0xf]
        %v255 = vld [vmem:[%s1 + $0x10] sm:$0xf]
        %v256 = vld [vmem:[%s1 + $0x14] sm:$0xf]
        %v257 = vld [vmem:[%s1 + $0x18] sm:$0xf]
        %v258 = vld [vmem:[%s1 + $0x1c] sm:$0xf]
        %v259 = vld [vmem:[%s1 + $0x20] sm:$0xf]
        %v260 = vld [vmem:[%s1 + $0x24] sm:$0xf]
        %v261 = vld [vmem:[%s1 + $0x28] sm:$0xf]
        %v262 = vld [vmem:[%s1 + $0x2c] sm:$0xf]
        %v263 = vld [vmem:[%s1 + $0x30] sm:$0xf]
        %v264 = vld [vmem:[%s1 + $0x34] sm:$0xf]
        %v265 = vld [vmem:[%s1 + $0x38] sm:$0xf]
        %v266 = vld [vmem:[%s1 + $0x3c] sm:$0xf]
        %v267 = vld [vmem:[%s2] sm:$0xff]
        %v268 = vld [vmem:[%s2 + $0x8] sm:$0xff]
        %v269 = vld [vmem:[%s2 + $0x10] sm:$0xff]
        %v270 = vld [vmem:[%s2 + $0x18] sm:$0xff]
        %v271 = vld [vmem:[%s2 + $0x20] sm:$0xff]
        %v272 = vld [vmem:[%s2 + $0x28] sm:$0xff]
        %v273 = vld [vmem:[%s2 + $0x30] sm:$0xff]
        %v274 = vld [vmem:[%s2 + $0x38] sm:$0xff]
        %v275 = vld [vmem:[%s2 + $0x40] sm:$0xff]
        %v276 = vld [vmem:[%s2 + $0x48] sm:$0xff]
        %v277 = vld [vmem:[%s2 + $0x50] sm:$0xff]
        %v278 = vld [vmem:[%s2 + $0x58] sm:$0xff]
        %v279 = vld [vmem:[%s2 + $0x60] sm:$0xff]
        %v280 = vld [vmem:[%s2 + $0x68] sm:$0xff]
        %v281 = vld [vmem:[%s2 + $0x70] sm:$0xff]
        %v282 = vld [vmem:[%s2 + $0x78] sm:$0xff]
        %284 = vset.pattern.permute.xlu0 0
        %285 = vperm.xlu0 %284, %v267
        %v286 = vpop.permute.xlu0 %285
        %289 = vset.pattern.permute.xlu0 0
        %290 = vperm.xlu0 %289, %v268
        %v291 = vpop.permute.xlu0 %290
        %294 = vset.pattern.permute.xlu0 0
        %295 = vperm.xlu0 %294, %v269
        %v296 = vpop.permute.xlu0 %295
        %299 = vset.pattern.permute.xlu0 0
        %300 = vperm.xlu0 %299, %v270
        %v301 = vpop.permute.xlu0 %300
        %304 = vset.pattern.permute.xlu0 0
        %305 = vperm.xlu0 %304, %v271
        %v306 = vpop.permute.xlu0 %305
        %309 = vset.pattern.permute.xlu0 0
        %310 = vperm.xlu0 %309, %v272
        %v311 = vpop.permute.xlu0 %310
        %314 = vset.pattern.permute.xlu0 0
        %315 = vperm.xlu0 %314, %v273
        %v316 = vpop.permute.xlu0 %315
        %319 = vset.pattern.permute.xlu0 0
        %320 = vperm.xlu0 %319, %v274
        %v321 = vpop.permute.xlu0 %320
        %324 = vset.pattern.permute.xlu0 0
        %325 = vperm.xlu0 %324, %v275
        %v326 = vpop.permute.xlu0 %325
        %329 = vset.pattern.permute.xlu0 0
        %330 = vperm.xlu0 %329, %v276
        %v331 = vpop.permute.xlu0 %330
        %334 = vset.pattern.permute.xlu0 0
        %335 = vperm.xlu0 %334, %v277
        %v336 = vpop.permute.xlu0 %335
        %339 = vset.pattern.permute.xlu0 0
        %340 = vperm.xlu0 %339, %v278
        %v341 = vpop.permute.xlu0 %340
        %344 = vset.pattern.permute.xlu0 0
        %345 = vperm.xlu0 %344, %v279
        %v346 = vpop.permute.xlu0 %345
        %349 = vset.pattern.permute.xlu0 0
        %350 = vperm.xlu0 %349, %v280
        %v351 = vpop.permute.xlu0 %350
        %354 = vset.pattern.permute.xlu0 0
        %355 = vperm.xlu0 %354, %v281
        %v356 = vpop.permute.xlu0 %355
        %359 = vset.pattern.permute.xlu0 0
        %360 = vperm.xlu0 %359, %v282
        %v361 = vpop.permute.xlu0 %360
        %v379 = vunpack.c.l.b16 %v251
        %v380 = vunpack.c.l.b16 %v252
        %v381 = vunpack.c.l.b16 %v253
        %v382 = vunpack.c.l.b16 %v254
        %v383 = vunpack.c.l.b16 %v255
        %v384 = vunpack.c.l.b16 %v256
        %v385 = vunpack.c.l.b16 %v257
        %v386 = vunpack.c.l.b16 %v258
        %v387 = vunpack.c.l.b16 %v259
        %v388 = vunpack.c.l.b16 %v260
        %v389 = vunpack.c.l.b16 %v261
        %v390 = vunpack.c.l.b16 %v262
        %v391 = vunpack.c.l.b16 %v263
        %v392 = vunpack.c.l.b16 %v264
        %v393 = vunpack.c.l.b16 %v265
        %v394 = vunpack.c.l.b16 %v266
        %v395 = vpack.c.b16 %v380, %v379
        %v396 = vpack.c.b16 %v382, %v381
        %v397 = vpack.c.b16 %v384, %v383
        %v398 = vpack.c.b16 %v386, %v385
        %v399 = vpack.c.b16 %v388, %v387
        %v400 = vpack.c.b16 %v390, %v389
        %v401 = vpack.c.b16 %v392, %v391
        %v402 = vpack.c.b16 %v394, %v393
        %v409 = vunpack.c.l.b16 %v245
        %v410 = vunpack.c.h.b16 %v245
        %v411 = vunpack.c.l.b16 %v246
        %v412 = vunpack.c.h.b16 %v246
        %v413 = vunpack.c.l.b16 %v247
        %v414 = vunpack.c.h.b16 %v247
        %v415 = vunpack.c.l.b16 %v248
        %v416 = vunpack.c.h.b16 %v248
        %v417 = vunpack.c.l.b16 %v249
        %v418 = vunpack.c.h.b16 %v249
        %v419 = vunpack.c.l.b16 %v250
        %v420 = vunpack.c.h.b16 %v250
        %v421 = vpack.c.b16 %v411, %v409
        %v422 = vpack.c.b16 %v412, %v410
        %v423 = vpack.c.b16 %v415, %v413
        %v424 = vpack.c.b16 %v416, %v414
        %v425 = vpack.c.b16 %v419, %v417
        %v426 = vpack.c.b16 %v420, %v418
        %vm433 = vcmask 392192
        %v435 = vsel %vm433, %v395, 0
        %v438 = vsel %vm433, %v396, 0
        %v441 = vsel %vm433, %v397, 0
        %v444 = vsel %vm433, %v398, 0
        %v447 = vsel %vm433, %v399, 0
        %v450 = vsel %vm433, %v400, 0
        %v453 = vsel %vm433, %v401, 0
        %v456 = vsel %vm433, %v402, 0
        %458 = vmatprep.subr.bf16.mxu0 %v422
        %459 = vmatpush1.bf16.msra.mxu0 %v421
        %460 = vmatprep.subr.bf16.mxu0 %v424
        %461 = vmatpush1.bf16.msra.mxu0 %v423
        %462 = vmatprep.subr.bf16.mxu0 %v426
        %463 = vmatpush1.bf16.msra.mxu0 %v425
        %464 = vmatprep.subr.bf16.mxu0 0
        %465 = vmatpush1.bf16.msra.mxu0 0
        %466 = vmatprep.subr.bf16.mxu0 0
        %467 = vmatpush1.bf16.msra.mxu0 0
        %468 = vmatprep.subr.bf16.mxu0 0
        %469 = vmatpush1.bf16.msra.mxu0 0
        %470 = vmatprep.subr.bf16.mxu0 0
        %471 = vmatpush1.bf16.msra.mxu0 0
        %472 = vmatprep.subr.bf16.mxu0 0
        %473 = vmatpush1.bf16.msra.mxu0 0
        %474 = vmatprep.subr.bf16.mxu0 0
        %475 = vmatpush1.bf16.msra.mxu0 0
        %476 = vmatprep.subr.bf16.mxu0 0
        %477 = vmatpush1.bf16.msra.mxu0 0
        %478 = vmatprep.subr.bf16.mxu0 0
        %479 = vmatpush1.bf16.msra.mxu0 0
        %480 = vmatprep.subr.bf16.mxu0 0
        %481 = vmatpush1.bf16.msra.mxu0 0
        %482 = vmatprep.subr.bf16.mxu0 0
        %483 = vmatpush1.bf16.msra.mxu0 0
        %484 = vmatprep.subr.bf16.mxu0 0
        %485 = vmatpush1.bf16.msra.mxu0 0
        %486 = vmatprep.subr.bf16.mxu0 0
        %487 = vmatpush1.bf16.msra.mxu0 0
        %488 = vmatprep.subr.bf16.mxu0 0
        %489 = vmatpush1.bf16.msra.mxu0 0
        %490 = vmatprep.mubr.bf16.mxu0 0
        %491 = vmatmul.mubr.bf16.gmra.mrb[0].mxu0 %v435
        %v492 = vpop.f32.mrb[0].mxu0
        %v493 = vadd.f32 %v286, %v492
        %v494 = vpop.f32.mrb[0].mxu0
        %v495 = vadd.f32 %v286, %v494
        %v496 = vpop.f32.mrb[0].mxu0
        %v497 = vadd.f32 %v291, %v496
        %v498 = vpop.f32.mrb[0].mxu0
        %v499 = vadd.f32 %v291, %v498
        %500 = vmatprep.mubr.bf16.mxu0 0
        %501 = vmatmul.mubr.bf16.gmra.mrb[0].mxu0 %v438
        %v502 = vpop.f32.mrb[0].mxu0
        %v503 = vadd.f32 %v296, %v502
        %v504 = vpop.f32.mrb[0].mxu0
        %v505 = vadd.f32 %v296, %v504
        %v506 = vpop.f32.mrb[0].mxu0
        %v507 = vadd.f32 %v301, %v506
        %v508 = vpop.f32.mrb[0].mxu0
        %v509 = vadd.f32 %v301, %v508
        %510 = vmatprep.mubr.bf16.mxu0 0
        %511 = vmatmul.mubr.bf16.gmra.mrb[0].mxu0 %v441
        %v512 = vpop.f32.mrb[0].mxu0
        %v513 = vadd.f32 %v306, %v512
        %v514 = vpop.f32.mrb[0].mxu0
        %v515 = vadd.f32 %v306, %v514
        %v516 = vpop.f32.mrb[0].mxu0
        %v517 = vadd.f32 %v311, %v516
        %v518 = vpop.f32.mrb[0].mxu0
        %v519 = vadd.f32 %v311, %v518
        %520 = vmatprep.mubr.bf16.mxu0 0
        %521 = vmatmul.mubr.bf16.gmra.mrb[0].mxu0 %v444
        %v522 = vpop.f32.mrb[0].mxu0
        %v523 = vadd.f32 %v316, %v522
        %v524 = vpop.f32.mrb[0].mxu0
        %v525 = vadd.f32 %v316, %v524
        %v526 = vpop.f32.mrb[0].mxu0
        %v527 = vadd.f32 %v321, %v526
        %v528 = vpop.f32.mrb[0].mxu0
        %v529 = vadd.f32 %v321, %v528
        %530 = vmatprep.mubr.bf16.mxu0 0
        %531 = vmatmul.mubr.bf16.gmra.mrb[0].mxu0 %v447
        %v532 = vpop.f32.mrb[0].mxu0
        %v533 = vadd.f32 %v326, %v532
        %v534 = vpop.f32.mrb[0].mxu0
        %v535 = vadd.f32 %v326, %v534
        %v536 = vpop.f32.mrb[0].mxu0
        %v537 = vadd.f32 %v331, %v536
        %v538 = vpop.f32.mrb[0].mxu0
        %v539 = vadd.f32 %v331, %v538
        %540 = vmatprep.mubr.bf16.mxu0 0
        %541 = vmatmul.mubr.bf16.gmra.mrb[0].mxu0 %v450
        %v542 = vpop.f32.mrb[0].mxu0
        %v543 = vadd.f32 %v336, %v542
        %v544 = vpop.f32.mrb[0].mxu0
        %v545 = vadd.f32 %v336, %v544
        %v546 = vpop.f32.mrb[0].mxu0
        %v547 = vadd.f32 %v341, %v546
        %v548 = vpop.f32.mrb[0].mxu0
        %v549 = vadd.f32 %v341, %v548
        %550 = vmatprep.mubr.bf16.mxu0 0
        %551 = vmatmul.mubr.bf16.gmra.mrb[0].mxu0 %v453
        %v552 = vpop.f32.mrb[0].mxu0
        %v553 = vadd.f32 %v346, %v552
        %v554 = vpop.f32.mrb[0].mxu0
        %v555 = vadd.f32 %v346, %v554
        %v556 = vpop.f32.mrb[0].mxu0
        %v557 = vadd.f32 %v351, %v556
        %v558 = vpop.f32.mrb[0].mxu0
        %v559 = vadd.f32 %v351, %v558
        %560 = vmatprep.mubr.bf16.mxu0 0
        %561 = vmatmul.mubr.bf16.gmra.mrb[0].mxu0 %v456
        %v562 = vpop.f32.mrb[0].mxu0
        %v563 = vadd.f32 %v356, %v562
        %v564 = vpop.f32.mrb[0].mxu0
        %v565 = vadd.f32 %v356, %v564
        %v566 = vpop.f32.mrb[0].mxu0
        %v567 = vadd.f32 %v361, %v566
        %v568 = vpop.f32.mrb[0].mxu0
        %v569 = vadd.f32 %v361, %v568
        %570 = vdwg.mxu0
        %v571 = vmax.f32 %v493, %v503
        %v572 = vmax.f32 %v497, %v507
        %v573 = vmax.f32 %v571, %v513
        %v574 = vmax.f32 %v572, %v517
        %v575 = vmax.f32 %v573, %v523
        %v576 = vmax.f32 %v574, %v527
        %v577 = vmax.f32 %v575, %v533
        %v578 = vmax.f32 %v576, %v537
        %v579 = vmax.f32 %v577, %v543
        %v580 = vmax.f32 %v578, %v547
        %v581 = vmax.f32 %v579, %v553
        %v582 = vmax.f32 %v580, %v557
        %v583 = vmax.f32 %v581, %v563
        %v584 = vmax.f32 %v582, %v567
        %v585 = vmax.f32 %v583, %v584
        %v586 = vrot.slane %v585, 4
        %v587 = vmax.f32 %v585, %v586
        %v588 = vrot.slane %v587, 2
        %v589 = vmax.f32 %v587, %v588
        %v590 = vrot.slane %v589, 1
        %v591 = vmax.f32 %v589, %v590
        %v592 = vmax.f32 %v495, %v505
        %v593 = vmax.f32 %v499, %v509
        %v594 = vmax.f32 %v592, %v515
        %v595 = vmax.f32 %v593, %v519
        %v596 = vmax.f32 %v594, %v525
        %v597 = vmax.f32 %v595, %v529
        %v598 = vmax.f32 %v596, %v535
        %v599 = vmax.f32 %v597, %v539
        %v600 = vmax.f32 %v598, %v545
        %v601 = vmax.f32 %v599, %v549
        %v602 = vmax.f32 %v600, %v555
        %v603 = vmax.f32 %v601, %v559
        %v604 = vmax.f32 %v602, %v565
        %v605 = vmax.f32 %v603, %v569
        %v606 = vmax.f32 %v604, %v605
        %v607 = vrot.slane %v606, 4
        %v608 = vmax.f32 %v606, %v607
        %v609 = vrot.slane %v608, 2
        %v610 = vmax.f32 %v608, %v609
        %v611 = vrot.slane %v610, 1
        %v612 = vmax.f32 %v610, %v611
        %v613 = vsub.f32 %v493, %v591
        %v614 = vsub.f32 %v495, %v612
        %v615 = vsub.f32 %v497, %v591
        %v616 = vsub.f32 %v499, %v612
        %v617 = vsub.f32 %v503, %v591
        %v618 = vsub.f32 %v505, %v612
        %v619 = vsub.f32 %v507, %v591
        %v620 = vsub.f32 %v509, %v612
        %v621 = vsub.f32 %v513, %v591
        %v622 = vsub.f32 %v515, %v612
        %v623 = vsub.f32 %v517, %v591
        %v624 = vsub.f32 %v519, %v612
        %v625 = vsub.f32 %v523, %v591
        %v626 = vsub.f32 %v525, %v612
        %v627 = vsub.f32 %v527, %v591
        %v628 = vsub.f32 %v529, %v612
        %v629 = vsub.f32 %v533, %v591
        %v630 = vsub.f32 %v535, %v612
        %v631 = vsub.f32 %v537, %v591
        %v632 = vsub.f32 %v539, %v612
        %v633 = vsub.f32 %v543, %v591
        %v634 = vsub.f32 %v545, %v612
        %v635 = vsub.f32 %v547, %v591
        %v636 = vsub.f32 %v549, %v612
        %v637 = vsub.f32 %v553, %v591
        %v638 = vsub.f32 %v555, %v612
        %v639 = vsub.f32 %v557, %v591
        %v640 = vsub.f32 %v559, %v612
        %v641 = vsub.f32 %v563, %v591
        %v642 = vsub.f32 %v565, %v612
        %v643 = vsub.f32 %v567, %v591
        %v644 = vsub.f32 %v569, %v612
        %v645 = vmul.f32 %v613, 1.442695
        %v646 = vpow.pop %v645
        %v647 = vmul.f32 %v614, 1.442695
        %v648 = vpow.pop %v647
        %v649 = vmul.f32 %v615, 1.442695
        %v650 = vpow.pop %v649
        %v651 = vmul.f32 %v616, 1.442695
        %v652 = vpow.pop %v651
        %v653 = vmul.f32 %v617, 1.442695
        %v654 = vpow.pop %v653
        %v655 = vmul.f32 %v618, 1.442695
        %v656 = vpow.pop %v655
        %v657 = vmul.f32 %v619, 1.442695
        %v658 = vpow.pop %v657
        %v659 = vmul.f32 %v620, 1.442695
        %v660 = vpow.pop %v659
        %v661 = vmul.f32 %v621, 1.442695
        %v662 = vpow.pop %v661
        %v663 = vmul.f32 %v622, 1.442695
        %v664 = vpow.pop %v663
        %v665 = vmul.f32 %v623, 1.442695
        %v666 = vpow.pop %v665
        %v667 = vmul.f32 %v624, 1.442695
        %v668 = vpow.pop %v667
        %v669 = vmul.f32 %v625, 1.442695
        %v670 = vpow.pop %v669
        %v671 = vmul.f32 %v626, 1.442695
        %v672 = vpow.pop %v671
        %v673 = vmul.f32 %v627, 1.442695
        %v674 = vpow.pop %v673
        %v675 = vmul.f32 %v628, 1.442695
        %v676 = vpow.pop %v675
        %v677 = vmul.f32 %v629, 1.442695
        %v678 = vpow.pop %v677
        %v679 = vmul.f32 %v630, 1.442695
        %v680 = vpow.pop %v679
        %v681 = vmul.f32 %v631, 1.442695
        %v682 = vpow.pop %v681
        %v683 = vmul.f32 %v632, 1.442695
        %v684 = vpow.pop %v683
        %v685 = vmul.f32 %v633, 1.442695
        %v686 = vpow.pop %v685
        %v687 = vmul.f32 %v634, 1.442695
        %v688 = vpow.pop %v687
        %v689 = vmul.f32 %v635, 1.442695
        %v690 = vpow.pop %v689
        %v691 = vmul.f32 %v636, 1.442695
        %v692 = vpow.pop %v691
        %v693 = vmul.f32 %v637, 1.442695
        %v694 = vpow.pop %v693
        %v695 = vmul.f32 %v638, 1.442695
        %v696 = vpow.pop %v695
        %v697 = vmul.f32 %v639, 1.442695
        %v698 = vpow.pop %v697
        %v699 = vmul.f32 %v640, 1.442695
        %v700 = vpow.pop %v699
        %v701 = vmul.f32 %v641, 1.442695
        %v702 = vpow.pop %v701
        %v703 = vmul.f32 %v642, 1.442695
        %v704 = vpow.pop %v703
        %v705 = vmul.f32 %v643, 1.442695
        %v706 = vpow.pop %v705
        %v707 = vmul.f32 %v644, 1.442695
        %v708 = vpow.pop %v707
        %v709 = vld [vmem:[%s242] sm:$0x3]
        %710 = vmatprep.subr.mxu0 %v648
        %711 = vmatpush1.msra.mxu0 %v646
        %712 = vmatprep.subr.mxu0 %v652
        %713 = vmatpush1.msra.mxu0 %v650
        %714 = vmatprep.subr.mxu0 %v656
        %715 = vmatpush1.msra.mxu0 %v654
        %716 = vmatprep.subr.mxu0 %v660
        %717 = vmatpush1.msra.mxu0 %v658
        %718 = vmatprep.subr.mxu0 %v664
        %719 = vmatpush1.msra.mxu0 %v662
        %720 = vmatprep.subr.mxu0 %v668
        %721 = vmatpush1.msra.mxu0 %v666
        %722 = vmatprep.subr.mxu0 %v672
        %723 = vmatpush1.msra.mxu0 %v670
        %724 = vmatprep.subr.mxu0 %v676
        %725 = vmatpush1.msra.mxu0 %v674
        %726 = vmatprep.subr.mxu0 %v680
        %727 = vmatpush1.msra.mxu0 %v678
        %728 = vmatprep.subr.mxu0 %v684
        %729 = vmatpush1.msra.mxu0 %v682
        %730 = vmatprep.subr.mxu0 %v688
        %731 = vmatpush1.msra.mxu0 %v686
        %732 = vmatprep.subr.mxu0 %v692
        %733 = vmatpush1.msra.mxu0 %v690
        %734 = vmatprep.subr.mxu0 %v696
        %735 = vmatpush1.msra.mxu0 %v694
        %736 = vmatprep.subr.mxu0 %v700
        %737 = vmatpush1.msra.mxu0 %v698
        %738 = vmatprep.subr.mxu0 %v704
        %739 = vmatpush1.msra.mxu0 %v702
        %740 = vmatprep.subr.mxu0 %v708
        %741 = vmatpush1.msra.mxu0 %v706
        %742 = vmatprep.subr.mxu0 0.0
        %743 = vmatpush1.msra.mxu0 0.0
        %744 = vmatprep.subr.mxu0 0.0
        %745 = vmatpush1.msra.mxu0 0.0
        %746 = vmatprep.subr.mxu0 0.0
        %747 = vmatpush1.msra.mxu0 0.0
        %748 = vmatprep.subr.mxu0 0.0
        %749 = vmatpush1.msra.mxu0 0.0
        %750 = vmatprep.subr.mxu0 0.0
        %751 = vmatpush1.msra.mxu0 0.0
        %752 = vmatprep.subr.mxu0 0.0
        %753 = vmatpush1.msra.mxu0 0.0
        %754 = vmatprep.subr.mxu0 0.0
        %755 = vmatpush1.msra.mxu0 0.0
        %756 = vmatprep.subr.mxu0 0.0
        %757 = vmatpush1.msra.mxu0 0.0
        %758 = vmatprep.subr.mxu0 0.0
        %759 = vmatpush1.msra.mxu0 0.0
        %760 = vmatprep.subr.mxu0 0.0
        %761 = vmatpush1.msra.mxu0 0.0
        %762 = vmatprep.subr.mxu0 0.0
        %763 = vmatpush1.msra.mxu0 0.0
        %764 = vmatprep.subr.mxu0 0.0
        %765 = vmatpush1.msra.mxu0 0.0
        %766 = vmatprep.subr.mxu0 0.0
        %767 = vmatpush1.msra.mxu0 0.0
        %768 = vmatprep.subr.mxu0 0.0
        %769 = vmatpush1.msra.mxu0 0.0
        %770 = vmatprep.subr.mxu0 0.0
        %771 = vmatpush1.msra.mxu0 0.0
        %772 = vmatprep.subr.mxu0 0.0
        %773 = vmatpush1.msra.mxu0 0.0
        %774 = vmatprep.mubr.f32.mxu0 0.0
        %775 = vmatmul.mubr.f32.gmra.mrb[0].mxu0 %v709
        %v776 = vpop.f32.mrb[0].mxu0
        %v777 = vadd.f32 0.0, %v776
        %v778 = vpop.f32.mrb[0].mxu0
        %v779 = vadd.f32 0.0, %v778
        %780 = vdwg.mxu0
        %v781 = vrcp.pop %v777
        %v782 = vrcp.pop %v779
        %v785 = vrot.slane %v781, 1
        %v786 = vrot.slane %v782, 1
        %v789 = vmul.f32 %v777, %v785
        %v790 = vmul.f32 %v779, %v786
        %v793 = vcombine.low %v789, %v790
        %v795 = vunpack.c.l.s4 1966171168
        %v796 = vunpack.c.0.s8 %v795
        %v797 = vlaneseq
        %v798 = vshrl.u32 %v797, 7
        %v799 = vsub.s32 %v796, %v798
        %v800 = vrot.slane %v793, %v799
        %v802 = vunpack.c.l.s4 1966171168
        %v803 = vunpack.c.0.s8 %v802
        %v804 = vlaneseq
        %v805 = vshrl.u32 %v804, 7
        %v806 = vsub.s32 %v803, %v805
        %v807 = vrot.slane %v800, %v806
        %v809 = vlaneseq
        %vm810 = vcmp.ge.s32.totalorder %v809, 0
        %vm811 = vcmp.lt.s32.totalorder %v809, 256
        %vm812 = vmand %vm810, %vm811
        %813 = vst.msk [vmem:[%s228] sm:$0x3] %vm812, %v807
        %s814 = sand.u32 %s136, 1
        %s815 = scalar_lea.sflag [#allocation3], %s814
        %s816 = sand.u32 %s136, 1
        %s817 = smul.addr %s816, 2
        %s818 = scalar_lea.vmem [#allocation2], %s817
        // Predicated region
        $region37: #{tpu_custom_call.1} parent=35 // pred_check
          %p819 = pneg %p146
        $region38: #{tpu_custom_call.1} parent=35 // pred_check_branch
          %821 = sbr.rel (%p819) target = $region40
        $region39: #{tpu_custom_call.1} parent=35 // pred_region
          %s822 = smul.u32 2, %s23
          %s824 = ssub.s32 32, 32
          %825 = vsyncadd %s815, %s824
          %s826 = smul.addr %s22, 2
          %s827 = sadd.s32 %s822, %s826
          %s828 = smul.addr %s827, 16
          %s829 = scalar_lea.hbm %s4, %s828
          %s831 = sshll.u32 %s818, 4
          %s832 = int_to_ptr.vmem [resolvable:$true] %s831
          %834 = dma.vmem_to_hbm [thread:$0]  %s832, 32, %s829, %s815
        $region40: #{tpu_custom_call.1} parent=35 // pred_fallthru
          _
      $region36: #{tpu_custom_call.1} parent=5 // pred_fallthru
        _
      %p835 = scmp.le.s32.totalorder 2, %s13
      // Predicated region
      $region41: #{tpu_custom_call.1} parent=5 // pred_check
        %p836 = pneg %p835
      $region42: #{tpu_custom_call.1} parent=5 // pred_check_branch
        %838 = sbr.rel (%p836) target = $region44
      $region43: #{tpu_custom_call.1} parent=5 // pred_region
        %s839 = ssub.s32 %s13, 2
        // Predicated region
        $region45: #{tpu_custom_call.1} parent=43 // pred_check
          %p840 = pneg %p152
        $region46: #{tpu_custom_call.1} parent=43 // pred_check_branch
          %842 = sbr.rel (%p840) target = $region48
        $region47: #{tpu_custom_call.1} parent=43 // pred_region
          %s843 = sand.u32 %s137, 1
          %s844 = scalar_lea.sflag [#allocation3], %s843
          %s845 = sand.u32 %s137, 1
          %s846 = smul.addr %s845, 2
          %s847 = scalar_lea.vmem [#allocation2], %s846
          %848 = dma.done %s844, 32
        $region48: #{tpu_custom_call.1} parent=43 // pred_fallthru
          _
      $region44: #{tpu_custom_call.1} parent=5 // pred_fallthru
        _
    $region6: #{tpu_custom_call.1} parent=1 // loop_footer
      %s17 = sadd.s32 1, %s13
    $region7: #{tpu_custom_call.1} parent=1 // loop_footer_branch
      %12 = sbr.rel target = $region3
    $region8: #{tpu_custom_call.1} parent=1 // loop_exit
      _
    %849 = vsyncpa [#allocation3], 1
    %s850 = scalar_lea.sflag [#allocation3], 1
    %851 = vsyncpa %s850, 1

</llo_original>
